<compile_context>
chip_gen: v5e
topology: v5e:2x2
jax: 0.10.0
libtpu: 0.0.40
codegen_flags: <defaults>
</compile_context>

<pallas_src>
import math
from functools import partial

import jax
import jax.numpy as jnp
import numpy as np
from jax.experimental import pallas as pl
from jax.experimental.pallas import tpu as pltpu

PAD = 0  # Constants.PAD


# ---------------------------------------------------------------------------
# Kernel 1: scaled-dot-product attention + copy gate, once per (batch, retrieval).
# ---------------------------------------------------------------------------
def attn_kernel(q_ref, gh_ref, embs_ref, ids_ref, wk_ref, bk_ref, wvc_ref, bvc_ref,
                w_ref, pc_ref, *, copy_scale, inv_sqrt_d):
    q = q_ref[0]              # (T, D) bf16  (precomputed hid @ Wqp + bqp)
    embs = embs_ref[0, 0]     # (S, D) bf16
    ids = ids_ref[0, 0]       # (1, S) i32

    # K projection (bf16 MXU operands, f32 accumulation).
    k = jnp.dot(embs, wk_ref[...], preferred_element_type=jnp.float32) + bk_ref[...]

    # scores = q @ k.T, contracting the last dims of both (no transpose materialized).
    scores = jax.lax.dot_general(
        q, k.astype(jnp.bfloat16), (((1,), (1,)), ((), ())),
        preferred_element_type=jnp.float32) * inv_sqrt_d          # (T, S)
    scores = jnp.where(ids == PAD, -1e9, scores)                  # mask PAD keys
    scores = scores - scores.max(axis=-1, keepdims=True)
    e = jnp.exp(scores)
    attn = e / e.sum(axis=-1, keepdims=True)                      # exact softmax (hoisted)

    # gate = hid@wq + bq + ctx@wc + bc.  Only ctx@wc is needed, so the V projection
    # collapses to vwc = embs @ (Wvp @ wc) + bvp @ wc  -> (S, 1).
    vwc = jnp.dot(embs, wvc_ref[...], preferred_element_type=jnp.float32) + bvc_ref[...]
    gate = gh_ref[0] + jnp.dot(attn, vwc, preferred_element_type=jnp.float32)  # (T, 1)
    p_copy = copy_scale * jax.nn.sigmoid(gate)

    pc_ref[0, 0] = p_copy
    w_ref[0, 0] = (p_copy * attn).astype(jnp.bfloat16)            # copy weights


# ---------------------------------------------------------------------------
# Kernel 2: one-hot scatter over a vocab tile + softmax(logits) mix.
# ---------------------------------------------------------------------------
def scatter_kernel(w_ref, ids_ref, logits_ref, lse_ref, ompc_ref, out_ref,
                   *, n_retrieval, rb, v_tile, seq_len):
    vt = pl.program_id(1)
    ri = pl.program_id(2)
    inv_r = 1.0 / n_retrieval

    col = jax.lax.broadcasted_iota(jnp.int32, (seq_len, v_tile), 1)   # (S, v_tile)
    off = vt * v_tile                                                  # offset ids, not iota

    def chunk(j):
        ids = ids_ref[0, j] - off                         # (S, 1)
        onehot = (ids == col).astype(jnp.bfloat16)        # (S, v_tile), exact 0/1
        # scatter_add over this vocab tile == one-hot MXU matmul.
        return jnp.dot(w_ref[0, j], onehot, preferred_element_type=jnp.float32)

    scat = chunk(0)
    for j in range(1, rb):         # rb is a small static int; unrolled at trace time
        scat = scat + chunk(j)

    # NOTE: correctness relies on the retrieval axis being the innermost grid axis
    # and marked "arbitrary" (resident output accumulator); do not reorder the grid.
    @pl.when(ri == 0)
    def _():
        out_ref[0] = scat * inv_r

    @pl.when(ri > 0)
    def _():
        out_ref[0] += scat * inv_r

    @pl.when(ri == pl.num_programs(2) - 1)
    def _():
        # Exact softmax tile (per-row logsumexp precomputed), added once per (b, vt).
        out_ref[0] += ompc_ref[0] * jnp.exp(logits_ref[0] - lse_ref[0])


# ---------------------------------------------------------------------------
# Host wrapper
# ---------------------------------------------------------------------------
def _full_spec_2d_grid(shape):
    n = len(shape)
    return pl.BlockSpec(shape, lambda b, r, _n=n: (0,) * _n)


def _largest_divisor_tile(V, target):
    if V <= target:
        return V
    if V % 128:
        return V                    # no lane-dense tiling possible; take the full vocab
    t = (target // 128) * 128
    while t >= 128 and V % t:
        t -= 128
    return t if t >= 128 else V


def _choose_rb(R, T, S, budget_bytes=4 * 1024 * 1024):
    per = T * S * 2 + S * 4         # bf16 copy-weight row + i32 ids per retrieval
    rb = max(1, min(R, budget_bytes // max(per, 1)))
    while R % rb:
        rb -= 1
    return rb


def pointer_forward(hidden_states, ret_text_embs, ret_input_ids, logits, params,
                    copy_scale=1.0, v_tile=None):
    B, T, D = hidden_states.shape
    _, R, S, _ = ret_text_embs.shape
    V = logits.shape[-1]
    bf16 = jnp.bfloat16

    try:
        vmem_cap = int(getattr(pltpu.get_tpu_info(), "vmem_capacity_bytes",
                               128 * 1024 * 1024))
    except Exception:
        vmem_cap = 128 * 1024 * 1024

    if v_tile is None:
        # 2048-wide vocab tiles on 128 MiB parts (v5e/v6e), 1024 on 64 MiB (v7x).
        v_tile = _largest_divisor_tile(V, 2048 if vmem_cap >= 96 * 1024 * 1024 else 1024)
    assert v_tile == V or (V % v_tile == 0 and v_tile % 128 == 0), \
        "vocab tile must divide V and be lane-dense"
    n_vt = V // v_tile
    vmem_limit = int(min(max(vmem_cap - 24 * 1024 * 1024, 32 * 1024 * 1024),
                         96 * 1024 * 1024))

    rb = _choose_rb(R, T, S)
    n_rb = R // rb

    # --- batch-only precompute (tiny XLA matmuls, once per batch element) ---
    q_pre = (hidden_states @ params["Wqp"] + params["bqp"]).astype(bf16)     # (B,T,D)
    gate_h = hidden_states @ params["wq"] + params["bqc"]                    # (B,T,1) f32
    # Fold Wc into the V projection: only ctx @ wc is ever needed downstream.
    wvc = (params["Wvp"] @ params["wc"]).astype(bf16)                        # (D,1)
    bvc = (params["bvp"] @ params["wc"]).astype(jnp.float32)                 # (1,1)
    wk = params["Wkp"].astype(bf16)
    bk = params["bkp"].astype(jnp.float32)

    embs_b = ret_text_embs.astype(bf16)
    ids_row = ret_input_ids.reshape(B, R, 1, S).astype(jnp.int32)
    ids_col = ret_input_ids.reshape(B, R, S, 1).astype(jnp.int32)

    # Per-row log-normalizer of softmax(logits) so each vocab tile normalizes
    # independently inside kernel 2.
    # TODO(synk): on v5e this is an extra full read of logits; could be fused into a
    # prologue kernel if it shows up on the HBM roofline.
    lmax = jnp.max(logits, axis=-1, keepdims=True)
    lse = lmax + jnp.log(jnp.sum(jnp.exp(logits - lmax), axis=-1, keepdims=True))

    # --- kernel 1: attention + copy gate, grid (B, R) ---
    k1 = partial(attn_kernel, copy_scale=float(copy_scale),
                 inv_sqrt_d=1.0 / math.sqrt(D))
    w_all, p_copy = pl.pallas_call(
        k1,
        out_shape=(jax.ShapeDtypeStruct((B, R, T, S), bf16),
                   jax.ShapeDtypeStruct((B, R, T, 1), jnp.float32)),
        grid_spec=pltpu.PrefetchScalarGridSpec(
            num_scalar_prefetch=0,
            grid=(B, R),
            in_specs=[
                pl.BlockSpec((1, T, D), lambda b, r: (b, 0, 0)),         # q (bf16)
                pl.BlockSpec((1, T, 1), lambda b, r: (b, 0, 0)),         # hid@wq + biases
                pl.BlockSpec((1, 1, S, D), lambda b, r: (b, r, 0, 0)),   # ret embs
                pl.BlockSpec((1, 1, 1, S), lambda b, r: (b, r, 0, 0)),   # ids (row layout)
                _full_spec_2d_grid((D, D)),                              # Wkp (bf16)
                _full_spec_2d_grid((1, D)),                              # bkp
                _full_spec_2d_grid((D, 1)),                              # Wvp @ wc (bf16)
                _full_spec_2d_grid((1, 1)),                              # bvp @ wc
            ],
            out_specs=(pl.BlockSpec((1, 1, T, S), lambda b, r: (b, r, 0, 0)),
                       pl.BlockSpec((1, 1, T, 1), lambda b, r: (b, r, 0, 0))),
        ),
        compiler_params=pltpu.CompilerParams(
            dimension_semantics=("parallel", "parallel")),
    )(q_pre, gate_h, embs_b, ids_row, wk, bk, wvc, bvc)

    # Coefficient of the softmax(logits) term (tiny XLA reduction over R).
    one_minus_pbar = 1.0 - jnp.mean(p_copy, axis=1)            # (B, T, 1)

    # --- kernel 2: one-hot scatter + softmax mix, grid (B, n_vt, n_rb) ---
    k2 = partial(scatter_kernel, n_retrieval=R, rb=rb, v_tile=v_tile, seq_len=S)
    probs = pl.pallas_call(
        k2,
        out_shape=jax.ShapeDtypeStruct((B, T, V), jnp.float32),
        grid_spec=pltpu.PrefetchScalarGridSpec(
            num_scalar_prefetch=0,
            grid=(B, n_vt, n_rb),                 # retrieval chunks innermost (reduction)
            in_specs=[
                pl.BlockSpec((1, rb, T, S), lambda b, vt, r: (b, r, 0, 0)),   # copy weights
                pl.BlockSpec((1, rb, S, 1), lambda b, vt, r: (b, r, 0, 0)),   # ids (col layout)
                pl.BlockSpec((1, T, v_tile), lambda b, vt, r: (b, 0, vt)),    # logits tile
                pl.BlockSpec((1, T, 1), lambda b, vt, r: (b, 0, 0)),          # logsumexp
                pl.BlockSpec((1, T, 1), lambda b, vt, r: (b, 0, 0)),          # 1 - mean p_copy
            ],
            out_specs=pl.BlockSpec((1, T, v_tile), lambda b, vt, r: (b, 0, vt)),
        ),
        compiler_params=pltpu.CompilerParams(
            dimension_semantics=("parallel", "parallel", "arbitrary"),
            vmem_limit_bytes=vmem_limit),
    )(w_all, ids_col, logits, lse, one_minus_pbar)

    return probs


# ---------------------------------------------------------------------------
# Pure-JAX f32 reference mirroring the PyTorch forward (eval mode).
# ---------------------------------------------------------------------------
def pointer_reference(hidden_states, ret_text_embs, ret_input_ids, logits, params,
                      copy_scale=1.0):
    B, T, D = hidden_states.shape
    _, R, S, _ = ret_text_embs.shape
    V = logits.shape[-1]
    hs = jnp.broadcast_to(hidden_states[:, None], (B, R, T, D))
    q = hs @ params["Wqp"] + params["bqp"]
    k = ret_text_embs @ params["Wkp"] + params["bkp"]
    v = ret_text_embs @ params["Wvp"] + params["bvp"]
    scores = jnp.einsum("brtd,brsd->brts", q, k) / math.sqrt(D)
    mask = (ret_input_ids == PAD)[:, :, None, :]
    scores = jnp.where(mask, -1e9, scores)
    attn = jax.nn.softmax(scores, axis=-1)
    ctx = jnp.einsum("brts,brsd->brtd", attn, v)
    gate = hs @ params["wq"] + ctx @ params["wc"] + params["bqc"]
    p_copy = copy_scale * jax.nn.sigmoid(gate)                 # (B,R,T,1)
    lsm = jax.nn.softmax(logits, axis=-1)[:, None]             # (B,1,T,V)
    base = (1.0 - p_copy) * lsm
    onehot = jax.nn.one_hot(ret_input_ids, V, dtype=jnp.float32)  # (B,R,S,V)
    scattered = jnp.einsum("brts,brsv->brtv", p_copy * attn, onehot)
    return (base + scattered).mean(axis=1)                     # (B,T,V)


if __name__ == "__main__":
    B, R, T, S, D, V = 2, 2, 8, 8, 32, 128
    copy_scale = 1.0

    key = jax.random.PRNGKey(0)
    ks = jax.random.split(key, 12)

    hidden_states = jax.random.normal(ks[0], (B, T, D), jnp.float32)
    ret_text_embs = jax.random.normal(ks[1], (B, R, S, D), jnp.float32)
    ret_input_ids = jax.random.randint(ks[2], (B, R, S), 0, V, jnp.int32)
    ret_input_ids = ret_input_ids.at[:, :, -2:].set(PAD)   # exercise PAD masking
    logits = jax.random.normal(ks[3], (B, T, V), jnp.float32)

    # Deterministic parameter init (nn.Linear(W: out x in) stored transposed as in x out).
    params = {
        "Wqp": 0.1 * jax.random.normal(ks[4], (D, D), jnp.float32),
        "bqp": 0.1 * jax.random.normal(ks[5], (1, D), jnp.float32),
        "Wkp": 0.1 * jax.random.normal(ks[6], (D, D), jnp.float32),
        "bkp": 0.1 * jax.random.normal(ks[7], (1, D), jnp.float32),
        "Wvp": 0.1 * jax.random.normal(ks[8], (D, D), jnp.float32),
        "bvp": 0.1 * jax.random.normal(ks[9], (1, D), jnp.float32),
        "wq": 0.1 * jax.random.normal(ks[10], (D, 1), jnp.float32),
        "wc": 0.1 * jax.random.normal(ks[11], (D, 1), jnp.float32),
        "bqc": jnp.full((1, 1), 0.05, jnp.float32),  # Wq.bias + Wc.bias folded
    }

    out = pointer_forward(hidden_states, ret_text_embs, ret_input_ids, logits,
                          params, copy_scale=copy_scale)
    out = jax.block_until_ready(out)

    ref = pointer_reference(hidden_states, ret_text_embs, ret_input_ids, logits,
                            params, copy_scale=copy_scale)
    # Tolerance reflects bf16 MXU operands / bf16 copy weights vs. the pure-f32 reference.
    np.testing.assert_allclose(np.asarray(out), np.asarray(ref),
                               rtol=2e-2, atol=2e-3)
    print("KERNEL_OK")
</pallas_src>

<mosaic_0001>
module attributes {stable_mosaic.version = 11 : i64} {
  func.func @attn_kernel(%arg0: i32, %arg1: i32, %arg2: memref<1x8x32xbf16, #tpu.memory_space<vmem>>, %arg3: memref<1x8x1xf32, #tpu.memory_space<vmem>>, %arg4: memref<1x1x8x32xbf16, #tpu.memory_space<vmem>>, %arg5: memref<1x1x1x8xi32, #tpu.memory_space<vmem>>, %arg6: memref<32x32xbf16, #tpu.memory_space<vmem>>, %arg7: memref<1x32xf32, #tpu.memory_space<vmem>>, %arg8: memref<32x1xbf16, #tpu.memory_space<vmem>>, %arg9: memref<1x1xf32, #tpu.memory_space<vmem>>, %arg10: memref<1x1x8x8xbf16, #tpu.memory_space<vmem>>, %arg11: memref<1x1x8x1xf32, #tpu.memory_space<vmem>>) attributes {dimension_semantics = [#tpu.dimension_semantics<parallel>, #tpu.dimension_semantics<parallel>], iteration_bounds = array<i64: 2, 2>, scalar_prefetch = 0 : i64, scratch_operands = 0 : i64, tpu.core_type = #tpu.core_type<tc>, window_params = [{transform_indices = @transform_0, window_bounds = array<i64: 1, 8, 32>}, {transform_indices = @transform_1, window_bounds = array<i64: 1, 8, 1>}, {transform_indices = @transform_2, window_bounds = array<i64: 1, 1, 8, 32>}, {transform_indices = @transform_3, window_bounds = array<i64: 1, 1, 1, 8>}, {pipeline_mode = #tpu.pipeline_mode<synchronous>, transform_indices = @transform_4, window_bounds = array<i64: 32, 32>}, {pipeline_mode = #tpu.pipeline_mode<synchronous>, transform_indices = @transform_5, window_bounds = array<i64: 1, 32>}, {pipeline_mode = #tpu.pipeline_mode<synchronous>, transform_indices = @transform_6, window_bounds = array<i64: 32, 1>}, {pipeline_mode = #tpu.pipeline_mode<synchronous>, transform_indices = @transform_7, window_bounds = array<i64: 1, 1>}, {transform_indices = @transform_8, window_bounds = array<i64: 1, 1, 8, 8>}, {transform_indices = @transform_9, window_bounds = array<i64: 1, 1, 8, 1>}]} {
    %c0 = arith.constant 0 : index
    %c0_0 = arith.constant 0 : index
    %c0_1 = arith.constant 0 : index
    %0 = vector.load %arg2[%c0, %c0_0, %c0_1] : memref<1x8x32xbf16, #tpu.memory_space<vmem>>, vector<1x8x32xbf16>
    %1 = vector.shape_cast %0 : vector<1x8x32xbf16> to vector<8x32xbf16>
    %c0_2 = arith.constant 0 : index
    %c0_3 = arith.constant 0 : index
    %c0_4 = arith.constant 0 : index
    %c0_5 = arith.constant 0 : index
    %2 = vector.load %arg4[%c0_2, %c0_3, %c0_4, %c0_5] : memref<1x1x8x32xbf16, #tpu.memory_space<vmem>>, vector<1x1x8x32xbf16>
    %3 = vector.shape_cast %2 : vector<1x1x8x32xbf16> to vector<8x32xbf16>
    %c0_6 = arith.constant 0 : index
    %c0_7 = arith.constant 0 : index
    %c0_8 = arith.constant 0 : index
    %c0_9 = arith.constant 0 : index
    %4 = vector.load %arg5[%c0_6, %c0_7, %c0_8, %c0_9] : memref<1x1x1x8xi32, #tpu.memory_space<vmem>>, vector<1x1x1x8xi32>
    %5 = vector.shape_cast %4 : vector<1x1x1x8xi32> to vector<1x8xi32>
    %c0_10 = arith.constant 0 : index
    %c0_11 = arith.constant 0 : index
    %6 = vector.load %arg6[%c0_10, %c0_11] : memref<32x32xbf16, #tpu.memory_space<vmem>>, vector<32x32xbf16>
    %cst = arith.constant dense<0.000000e+00> : vector<8x32xf32>
    %7 = tpu.matmul %3, %6, %cst {dimension_numbers = #tpu.dot_dimension_numbers<[1], [0], [0], [1], [0, 0, 1, 1], [], []>} : vector<8x32xbf16>, vector<32x32xbf16>, vector<8x32xf32> -> vector<8x32xf32>
    %c0_12 = arith.constant 0 : index
    %c0_13 = arith.constant 0 : index
    %8 = vector.load %arg7[%c0_12, %c0_13] : memref<1x32xf32, #tpu.memory_space<vmem>>, vector<1x32xf32>
    %9 = vector.broadcast %8 : vector<1x32xf32> to vector<8x32xf32>
    %10 = arith.addf %7, %9 : vector<8x32xf32>
    %11 = arith.truncf %10 : vector<8x32xf32> to vector<8x32xbf16>
    %cst_14 = arith.constant dense<0.000000e+00> : vector<8x8xf32>
    %12 = tpu.matmul %1, %11, %cst_14 {dimension_numbers = #tpu.dot_dimension_numbers<[1], [1], [0], [0], [0, 0, 1, 0], [], []>} : vector<8x32xbf16>, vector<8x32xbf16>, vector<8x8xf32> -> vector<8x8xf32>
    %cst_15 = arith.constant 0.176776692 : f32
    %13 = vector.broadcast %cst_15 : f32 to vector<8x8xf32>
    %14 = arith.mulf %12, %13 : vector<8x8xf32>
    %c0_i32 = arith.constant 0 : i32
    %15 = vector.broadcast %c0_i32 : i32 to vector<1x8xi32>
    %16 = arith.cmpi eq, %5, %15 : vector<1x8xi32>
    %cst_16 = arith.constant -1.000000e+09 : f32
    %17 = vector.shape_cast %16 : vector<1x8xi1> to vector<1x8xi1>
    %18 = vector.broadcast %17 : vector<1x8xi1> to vector<8x8xi1>
    %19 = vector.broadcast %cst_16 : f32 to vector<8x8xf32>
    %20 = arith.select %18, %19, %14 : vector<8x8xi1>, vector<8x8xf32>
    %cst_17 = arith.constant dense<0xFF800000> : vector<8xf32>
    %21 = vector.multi_reduction <maximumf>, %20, %cst_17 [1] : vector<8x8xf32> to vector<8xf32>
    %22 = vector.shape_cast %21 : vector<8xf32> to vector<8x1xf32>
    %23 = vector.broadcast %22 : vector<8x1xf32> to vector<8x8xf32>
    %24 = arith.subf %20, %23 : vector<8x8xf32>
    %25 = math.exp %24 : vector<8x8xf32>
    %cst_18 = arith.constant dense<0.000000e+00> : vector<8xf32>
    %26 = vector.multi_reduction <add>, %25, %cst_18 [1] : vector<8x8xf32> to vector<8xf32>
    %27 = vector.shape_cast %26 : vector<8xf32> to vector<8x1xf32>
    %28 = vector.broadcast %27 : vector<8x1xf32> to vector<8x8xf32>
    %29 = arith.divf %25, %28 : vector<8x8xf32>
    %c0_19 = arith.constant 0 : index
    %c0_20 = arith.constant 0 : index
    %30 = vector.load %arg8[%c0_19, %c0_20] : memref<32x1xbf16, #tpu.memory_space<vmem>>, vector<32x1xbf16>
    %cst_21 = arith.constant dense<0.000000e+00> : vector<8x1xf32>
    %31 = tpu.matmul %3, %30, %cst_21 {dimension_numbers = #tpu.dot_dimension_numbers<[1], [0], [0], [1], [0, 0, 1, 1], [], []>} : vector<8x32xbf16>, vector<32x1xbf16>, vector<8x1xf32> -> vector<8x1xf32>
    %c0_22 = arith.constant 0 : index
    %c0_23 = arith.constant 0 : index
    %32 = vector.load %arg9[%c0_22, %c0_23] : memref<1x1xf32, #tpu.memory_space<vmem>>, vector<1x1xf32>
    %33 = vector.broadcast %32 : vector<1x1xf32> to vector<8x1xf32>
    %34 = arith.addf %31, %33 : vector<8x1xf32>
    %c0_24 = arith.constant 0 : index
    %c0_25 = arith.constant 0 : index
    %c0_26 = arith.constant 0 : index
    %35 = vector.load %arg3[%c0_24, %c0_25, %c0_26] : memref<1x8x1xf32, #tpu.memory_space<vmem>>, vector<1x8x1xf32>
    %36 = vector.shape_cast %35 : vector<1x8x1xf32> to vector<8x1xf32>
    %cst_27 = arith.constant dense<0.000000e+00> : vector<8x1xf32>
    %37 = tpu.matmul %29, %34, %cst_27 {dimension_numbers = #tpu.dot_dimension_numbers<[1], [0], [0], [1], [0, 0, 1, 1], [], []>} : vector<8x8xf32>, vector<8x1xf32>, vector<8x1xf32> -> vector<8x1xf32>
    %38 = arith.addf %36, %37 : vector<8x1xf32>
    %39 = arith.negf %38 : vector<8x1xf32>
    %40 = math.exp %39 : vector<8x1xf32>
    %cst_28 = arith.constant 1.000000e+00 : f32
    %41 = vector.broadcast %cst_28 : f32 to vector<8x1xf32>
    %42 = arith.addf %41, %40 : vector<8x1xf32>
    %43 = arith.divf %41, %42 : vector<8x1xf32>
    %cst_29 = arith.constant 1.000000e+00 : f32
    %44 = vector.broadcast %cst_29 : f32 to vector<8x1xf32>
    %45 = arith.mulf %44, %43 : vector<8x1xf32>
    %c0_30 = arith.constant 0 : index
    %c0_31 = arith.constant 0 : index
    %c0_32 = arith.constant 0 : index
    %c0_33 = arith.constant 0 : index
    %46 = vector.load %arg11[%c0_30, %c0_31, %c0_32, %c0_33] : memref<1x1x8x1xf32, #tpu.memory_space<vmem>>, vector<1x1x8x1xf32>
    %47 = vector.shape_cast %46 : vector<1x1x8x1xf32> to vector<8x1xf32>
    %48 = vector.shape_cast %45 : vector<8x1xf32> to vector<1x1x8x1xf32>
    tpu.vector_store %arg11[%c0_30, %c0_31, %c0_32, %c0_33], %48 {strides = array<i32>} : memref<1x1x8x1xf32, #tpu.memory_space<vmem>>, vector<1x1x8x1xf32>,
    %49 = vector.broadcast %45 : vector<8x1xf32> to vector<8x8xf32>
    %50 = arith.mulf %49, %29 : vector<8x8xf32>
    %51 = arith.truncf %50 : vector<8x8xf32> to vector<8x8xbf16>
    %c0_34 = arith.constant 0 : index
    %c0_35 = arith.constant 0 : index
    %c0_36 = arith.constant 0 : index
    %c0_37 = arith.constant 0 : index
    %52 = vector.load %arg10[%c0_34, %c0_35, %c0_36, %c0_37] : memref<1x1x8x8xbf16, #tpu.memory_space<vmem>>, vector<1x1x8x8xbf16>
    %53 = vector.shape_cast %52 : vector<1x1x8x8xbf16> to vector<8x8xbf16>
    %54 = vector.shape_cast %51 : vector<8x8xbf16> to vector<1x1x8x8xbf16>
    tpu.vector_store %arg10[%c0_34, %c0_35, %c0_36, %c0_37], %54 {strides = array<i32>} : memref<1x1x8x8xbf16, #tpu.memory_space<vmem>>, vector<1x1x8x8xbf16>,
    return
  }
  func.func @transform_0(%arg0: i32, %arg1: i32) -> (i32, i32, i32) {
    %c0_i32 = arith.constant 0 : i32
    %c0_i32_0 = arith.constant 0 : i32
    %c0_i32_1 = arith.constant 0 : i32
    return %arg0, %c0_i32, %c0_i32_0 : i32, i32, i32
  }
  func.func @transform_1(%arg0: i32, %arg1: i32) -> (i32, i32, i32) {
    %c0_i32 = arith.constant 0 : i32
    %c0_i32_0 = arith.constant 0 : i32
    %c0_i32_1 = arith.constant 0 : i32
    return %arg0, %c0_i32, %c0_i32_0 : i32, i32, i32
  }
  func.func @transform_2(%arg0: i32, %arg1: i32) -> (i32, i32, i32, i32) {
    %c0_i32 = arith.constant 0 : i32
    %c0_i32_0 = arith.constant 0 : i32
    %c0_i32_1 = arith.constant 0 : i32
    return %arg0, %arg1, %c0_i32, %c0_i32_0 : i32, i32, i32, i32
  }
  func.func @transform_3(%arg0: i32, %arg1: i32) -> (i32, i32, i32, i32) {
    %c0_i32 = arith.constant 0 : i32
    %c0_i32_0 = arith.constant 0 : i32
    %c0_i32_1 = arith.constant 0 : i32
    return %arg0, %arg1, %c0_i32, %c0_i32_0 : i32, i32, i32, i32
  }
  func.func @transform_4(%arg0: i32, %arg1: i32) -> (i32, i32) {
    %c0_i32 = arith.constant 0 : i32
    %c0_i32_0 = arith.constant 0 : i32
    %c0_i32_1 = arith.constant 0 : i32
    return %c0_i32, %c0_i32_0 : i32, i32
  }
  func.func @transform_5(%arg0: i32, %arg1: i32) -> (i32, i32) {
    %c0_i32 = arith.constant 0 : i32
    %c0_i32_0 = arith.constant 0 : i32
    %c0_i32_1 = arith.constant 0 : i32
    return %c0_i32, %c0_i32_0 : i32, i32
  }
  func.func @transform_6(%arg0: i32, %arg1: i32) -> (i32, i32) {
    %c0_i32 = arith.constant 0 : i32
    %c0_i32_0 = arith.constant 0 : i32
    %c0_i32_1 = arith.constant 0 : i32
    return %c0_i32, %c0_i32_0 : i32, i32
  }
  func.func @transform_7(%arg0: i32, %arg1: i32) -> (i32, i32) {
    %c0_i32 = arith.constant 0 : i32
    %c0_i32_0 = arith.constant 0 : i32
    %c0_i32_1 = arith.constant 0 : i32
    return %c0_i32, %c0_i32_0 : i32, i32
  }
  func.func @transform_8(%arg0: i32, %arg1: i32) -> (i32, i32, i32, i32) {
    %c0_i32 = arith.constant 0 : i32
    %c0_i32_0 = arith.constant 0 : i32
    %c0_i32_1 = arith.constant 0 : i32
    return %arg0, %arg1, %c0_i32, %c0_i32_0 : i32, i32, i32, i32
  }
  func.func @transform_9(%arg0: i32, %arg1: i32) -> (i32, i32, i32, i32) {
    %c0_i32 = arith.constant 0 : i32
    %c0_i32_0 = arith.constant 0 : i32
    %c0_i32_1 = arith.constant 0 : i32
    return %arg0, %arg1, %c0_i32, %c0_i32_0 : i32, i32, i32, i32
  }
}

</mosaic_0001>

<llo_original>
// kernel: tpu_custom_call.1
$region0: #{tpu_custom_call.1}
  #allocation0 [shape = 'u32[]', space=smem, size = 0x4, offset = 0x4, fixed_abs, tag = 'smem constant byte address 0x4 - core index']
  #allocation1 [shape = 'u32[72,128]{1,0:T(1,128)}', space=vmem, size = 0x9000, scoped, tag = 'internal scratch']
  #allocation2 [shape = 'f32[1,1]{1,0:T(1,128)S(1)}', space=vmem, size = 0x200, scoped, tag = 'scoped memory for tpu_custom_call.1']
  %s0 = inlined_call_operand.hbm [shape: bf16[2,8,32], index: 0, kind: input, shape index: {}]
  %s1 = inlined_call_operand.vmem [shape: f32[2,8,1], index: 1, kind: input, shape index: {}]
  %s2 = inlined_call_operand.vmem [shape: bf16[2,2,8,32], index: 2, kind: input, shape index: {}]
  %s3 = inlined_call_operand.hbm [shape: s32[2,2,1,8], index: 3, kind: input, shape index: {}]
  %s4 = inlined_call_operand.vmem [shape: bf16[32,32], index: 4, kind: input, shape index: {}]
  %s5 = inlined_call_operand.vmem [shape: f32[1,32], index: 5, kind: input, shape index: {}]
  %s6 = inlined_call_operand.vmem [shape: bf16[32,1], index: 6, kind: input, shape index: {}]
  %s7 = inlined_call_operand.<no memory space> [shape: f32[1,1], index: 7, kind: input, shape index: {}]
  %s8 = inlined_call_operand.hbm [shape: bf16[2,2,8,8], index: 8, kind: output, shape index: {0}]
  %s9 = inlined_call_operand.vmem [shape: f32[2,2,8,1], index: 9, kind: output, shape index: {1}]
  %10 = xla_tuple %s8, %s9
  %s11 = sld [smem:[#allocation0]]
  $region81: #{tpu_custom_call.1} parent=0
    _
  %s13 = ssub.s32 1, %s11
  %s14 = scalar_select 0, %s13, %s11
  %v15 = vstv %s7
  %16 = vst [vmem:[#allocation2] sm:$0x1] %v15
  $region1: #{tpu_custom_call.1} parent=0
    #allocation3 [shape = 'u8[4096]{0}', space=vmem, size = 0x1000, scoped, tag = 'input window, operand 0']
    #allocation4 [shape = 's32[2]{0}', space=sflag, size = 0x8, scoped, tag = 'scoped memory for tpu_custom_call.1']
    #allocation5 [shape = 's32[2]{0}', space=sflag, size = 0x8, scoped, tag = 'scoped memory for tpu_custom_call.1']
    #allocation6 [shape = 'u8[1024]{0}', space=vmem, size = 0x400, scoped, tag = 'input window, operand 3']
    #allocation7 [shape = 's32[2]{0}', space=sflag, size = 0x8, scoped, tag = 'scoped memory for tpu_custom_call.1']
    #allocation8 [shape = 'u8[4096]{0}', space=vmem, size = 0x1000, scoped, tag = 'output window, operand 0']
    %17 = vsyncpa [#allocation4], 0
    %s18 = scalar_lea.sflag [#allocation4], 1
    %19 = vsyncpa %s18, 0
    %20 = vsyncpa [#allocation7], 0
    %s21 = scalar_lea.sflag [#allocation7], 1
    %22 = vsyncpa %s21, 0
    %23 = vsyncpa [#allocation5], 0
    %s24 = scalar_lea.sflag [#allocation5], 1
    %25 = vsyncpa %s24, 0
    loop: start=0, step=1, limit=6
    $region2: #{tpu_custom_call.1} parent=1 // loop_pre_header
      _
    $region3: #{tpu_custom_call.1} parent=1 // loop_header
      %s27 = sphi 0, %s31
      %p28 = scmp.ge.s32.totalorder %s27, 6
      %s34 = sphi 0, %s46
      %s35 = sphi 0, %s42
      %s36 = sphi 0, %s34
      %s37 = sphi 0, %s35
      %s38 = sphi 0, %s36
      %s39 = sphi 0, %s37
      %s49 = sphi 0, %s51
      %s52 = sphi 0, %s49
      %s53 = sphi 0, %s52
      %s69 = sphi 0, %s53
      %s75 = sphi 0, %s77
      %s78 = sphi 0, %s75
      %s79 = sphi 0, %s78
      %s95 = sphi 0, %s79
      %s103 = sphi 0, %s105
      %s106 = sphi 0, %s103
      %s107 = sphi 0, %s106
      %s123 = sphi 0, %s107
      %s131 = sphi 0, %s133
      %s134 = sphi 0, %s131
      %s135 = sphi 0, %s134
      %s151 = sphi 0, %s135
      %s155 = sphi 0, %s155
      %s157 = sphi 0, %s155
      %s158 = sphi 0, %s157
      %s172 = sphi 0, %s158
      %s176 = sphi 0, %s176
      %s178 = sphi 0, %s176
      %s179 = sphi 0, %s178
      %s193 = sphi 0, %s179
      %s197 = sphi 0, %s197
      %s199 = sphi 0, %s197
      %s200 = sphi 0, %s199
      %s214 = sphi 0, %s200
      %s218 = sphi 0, %s218
      %s220 = sphi 0, %s218
      %s221 = sphi 0, %s220
      %s235 = sphi 0, %s221
      %s243 = sphi 0, %s245
      %s246 = sphi 0, %s243
      %s247 = sphi 0, %s246
      %s263 = sphi 0, %s247
      %s271 = sphi 0, %s273
      %s274 = sphi 0, %s271
      %s275 = sphi 0, %s274
      %s291 = sphi 0, %s275
    $region4: #{tpu_custom_call.1} parent=1 // loop_header_branch
      %30 = sbr.rel (%p28) target = $region8
    $region5: #{tpu_custom_call.1} parent=1 // loop_body
      %s32 = ssub.s32 %s27, 1
      %s33 = ssub.s32 %s27, 2
      %s40 = sadd.s32 1, %s35
      %p41 = scmp.ge.s32.totalorder %s40, 2
      %s42 = scalar_select %p41, 0, %s40
      %s43 = sadd.s32 1, %s34
      %s44 = scalar_select %p41, %s43, %s34
      %p45 = scmp.ge.s32.totalorder %s44, 2
      %s46 = scalar_select %p45, 0, %s44
      %s47 = ssub.s32 %s34, %s46
      %p48 = scmp.eq.s32.totalorder %s47, 0
      %s50 = sadd.s32 %s49, 1
      %s51 = scalar_select %p48, %s49, %s50
      %p54 = pneg %p48
      %p55 = scmp.eq.s32.totalorder %s27, 3
      %p56 = por %p54, %p55
      %p57 = scmp.ne.s32.totalorder %s49, %s52
      %p58 = scmp.eq.s32.totalorder %s27, 0
      %p59 = por %p57, %p58
      %p60 = scmp.ne.s32.totalorder %s49, %s52
      %p61 = scmp.eq.s32.totalorder %s32, 3
      %p62 = por %p60, %p61
      %p63 = scmp.ne.s32.totalorder %s52, %s53
      %p64 = scmp.eq.s32.totalorder %s32, 0
      %p65 = por %p63, %p64
      %p66 = scmp.ne.s32.totalorder %s52, %s53
      %p67 = scmp.eq.s32.totalorder %s33, 3
      %p68 = por %p66, %p67
      %p70 = scmp.ne.s32.totalorder %s53, %s69
      %p71 = scmp.eq.s32.totalorder %s33, 0
      %p72 = por %p70, %p71
      %s73 = ssub.s32 %s34, %s46
      %p74 = scmp.eq.s32.totalorder %s73, 0
      %s76 = sadd.s32 %s75, 1
      %s77 = scalar_select %p74, %s75, %s76
      %p80 = pneg %p74
      %p81 = scmp.eq.s32.totalorder %s27, 3
      %p82 = por %p80, %p81
      %p83 = scmp.ne.s32.totalorder %s75, %s78
      %p84 = scmp.eq.s32.totalorder %s27, 0
      %p85 = por %p83, %p84
      %p86 = scmp.ne.s32.totalorder %s75, %s78
      %p87 = scmp.eq.s32.totalorder %s32, 3
      %p88 = por %p86, %p87
      %p89 = scmp.ne.s32.totalorder %s78, %s79
      %p90 = scmp.eq.s32.totalorder %s32, 0
      %p91 = por %p89, %p90
      %p92 = scmp.ne.s32.totalorder %s78, %s79
      %p93 = scmp.eq.s32.totalorder %s33, 3
      %p94 = por %p92, %p93
      %p96 = scmp.ne.s32.totalorder %s79, %s95
      %p97 = scmp.eq.s32.totalorder %s33, 0
      %p98 = por %p96, %p97
      %s99 = ssub.s32 %s34, %s46
      %s100 = ssub.s32 %s35, %s42
      %s101 = sor.u32 %s99, %s100
      %p102 = scmp.eq.s32.totalorder %s101, 0
      %s104 = sadd.s32 %s103, 1
      %s105 = scalar_select %p102, %s103, %s104
      %p108 = pneg %p102
      %p109 = scmp.eq.s32.totalorder %s27, 3
      %p110 = por %p108, %p109
      %p111 = scmp.ne.s32.totalorder %s103, %s106
      %p112 = scmp.eq.s32.totalorder %s27, 0
      %p113 = por %p111, %p112
      %p114 = scmp.ne.s32.totalorder %s103, %s106
      %p115 = scmp.eq.s32.totalorder %s32, 3
      %p116 = por %p114, %p115
      %p117 = scmp.ne.s32.totalorder %s106, %s107
      %p118 = scmp.eq.s32.totalorder %s32, 0
      %p119 = por %p117, %p118
      %p120 = scmp.ne.s32.totalorder %s106, %s107
      %p121 = scmp.eq.s32.totalorder %s33, 3
      %p122 = por %p120, %p121
      %p124 = scmp.ne.s32.totalorder %s107, %s123
      %p125 = scmp.eq.s32.totalorder %s33, 0
      %p126 = por %p124, %p125
      %s127 = ssub.s32 %s34, %s46
      %s128 = ssub.s32 %s35, %s42
      %s129 = sor.u32 %s127, %s128
      %p130 = scmp.eq.s32.totalorder %s129, 0
      %s132 = sadd.s32 %s131, 1
      %s133 = scalar_select %p130, %s131, %s132
      %p136 = pneg %p130
      %p137 = scmp.eq.s32.totalorder %s27, 3
      %p138 = por %p136, %p137
      %p139 = scmp.ne.s32.totalorder %s131, %s134
      %p140 = scmp.eq.s32.totalorder %s27, 0
      %p141 = por %p139, %p140
      %p142 = scmp.ne.s32.totalorder %s131, %s134
      %p143 = scmp.eq.s32.totalorder %s32, 3
      %p144 = por %p142, %p143
      %p145 = scmp.ne.s32.totalorder %s134, %s135
      %p146 = scmp.eq.s32.totalorder %s32, 0
      %p147 = por %p145, %p146
      %p148 = scmp.ne.s32.totalorder %s134, %s135
      %p149 = scmp.eq.s32.totalorder %s33, 3
      %p150 = por %p148, %p149
      %p152 = scmp.ne.s32.totalorder %s135, %s151
      %p153 = scmp.eq.s32.totalorder %s33, 0
      %p154 = por %p152, %p153
      %s156 = sadd.s32 %s155, 1
      %p159 = scmp.eq.s32.totalorder %s27, 3
      %p160 = scmp.ne.s32.totalorder %s155, %s157
      %p161 = scmp.eq.s32.totalorder %s27, 0
      %p162 = por %p160, %p161
      %p163 = scmp.ne.s32.totalorder %s155, %s157
      %p164 = scmp.eq.s32.totalorder %s32, 3
      %p165 = por %p163, %p164
      %p166 = scmp.ne.s32.totalorder %s157, %s158
      %p167 = scmp.eq.s32.totalorder %s32, 0
      %p168 = por %p166, %p167
      %p169 = scmp.ne.s32.totalorder %s157, %s158
      %p170 = scmp.eq.s32.totalorder %s33, 3
      %p171 = por %p169, %p170
      %p173 = scmp.ne.s32.totalorder %s158, %s172
      %p174 = scmp.eq.s32.totalorder %s33, 0
      %p175 = por %p173, %p174
      %s177 = sadd.s32 %s176, 1
      %p180 = scmp.eq.s32.totalorder %s27, 3
      %p181 = scmp.ne.s32.totalorder %s176, %s178
      %p182 = scmp.eq.s32.totalorder %s27, 0
      %p183 = por %p181, %p182
      %p184 = scmp.ne.s32.totalorder %s176, %s178
      %p185 = scmp.eq.s32.totalorder %s32, 3
      %p186 = por %p184, %p185
      %p187 = scmp.ne.s32.totalorder %s178, %s179
      %p188 = scmp.eq.s32.totalorder %s32, 0
      %p189 = por %p187, %p188
      %p190 = scmp.ne.s32.totalorder %s178, %s179
      %p191 = scmp.eq.s32.totalorder %s33, 3
      %p192 = por %p190, %p191
      %p194 = scmp.ne.s32.totalorder %s179, %s193
      %p195 = scmp.eq.s32.totalorder %s33, 0
      %p196 = por %p194, %p195
      %s198 = sadd.s32 %s197, 1
      %p201 = scmp.eq.s32.totalorder %s27, 3
      %p202 = scmp.ne.s32.totalorder %s197, %s199
      %p203 = scmp.eq.s32.totalorder %s27, 0
      %p204 = por %p202, %p203
      %p205 = scmp.ne.s32.totalorder %s197, %s199
      %p206 = scmp.eq.s32.totalorder %s32, 3
      %p207 = por %p205, %p206
      %p208 = scmp.ne.s32.totalorder %s199, %s200
      %p209 = scmp.eq.s32.totalorder %s32, 0
      %p210 = por %p208, %p209
      %p211 = scmp.ne.s32.totalorder %s199, %s200
      %p212 = scmp.eq.s32.totalorder %s33, 3
      %p213 = por %p211, %p212
      %p215 = scmp.ne.s32.totalorder %s200, %s214
      %p216 = scmp.eq.s32.totalorder %s33, 0
      %p217 = por %p215, %p216
      %s219 = sadd.s32 %s218, 1
      %p222 = scmp.eq.s32.totalorder %s27, 3
      %p223 = scmp.ne.s32.totalorder %s218, %s220
      %p224 = scmp.eq.s32.totalorder %s27, 0
      %p225 = por %p223, %p224
      %p226 = scmp.ne.s32.totalorder %s218, %s220
      %p227 = scmp.eq.s32.totalorder %s32, 3
      %p228 = por %p226, %p227
      %p229 = scmp.ne.s32.totalorder %s220, %s221
      %p230 = scmp.eq.s32.totalorder %s32, 0
      %p231 = por %p229, %p230
      %p232 = scmp.ne.s32.totalorder %s220, %s221
      %p233 = scmp.eq.s32.totalorder %s33, 3
      %p234 = por %p232, %p233
      %p236 = scmp.ne.s32.totalorder %s221, %s235
      %p237 = scmp.eq.s32.totalorder %s33, 0
      %p238 = por %p236, %p237
      %s239 = ssub.s32 %s34, %s46
      %s240 = ssub.s32 %s35, %s42
      %s241 = sor.u32 %s239, %s240
      %p242 = scmp.eq.s32.totalorder %s241, 0
      %s244 = sadd.s32 %s243, 1
      %s245 = scalar_select %p242, %s243, %s244
      %p248 = pneg %p242
      %p249 = scmp.eq.s32.totalorder %s27, 3
      %p250 = por %p248, %p249
      %p251 = scmp.ne.s32.totalorder %s243, %s246
      %p252 = scmp.eq.s32.totalorder %s27, 0
      %p253 = por %p251, %p252
      %p254 = scmp.ne.s32.totalorder %s243, %s246
      %p255 = scmp.eq.s32.totalorder %s32, 3
      %p256 = por %p254, %p255
      %p257 = scmp.ne.s32.totalorder %s246, %s247
      %p258 = scmp.eq.s32.totalorder %s32, 0
      %p259 = por %p257, %p258
      %p260 = scmp.ne.s32.totalorder %s246, %s247
      %p261 = scmp.eq.s32.totalorder %s33, 3
      %p262 = por %p260, %p261
      %p264 = scmp.ne.s32.totalorder %s247, %s263
      %p265 = scmp.eq.s32.totalorder %s33, 0
      %p266 = por %p264, %p265
      %s267 = ssub.s32 %s34, %s46
      %s268 = ssub.s32 %s35, %s42
      %s269 = sor.u32 %s267, %s268
      %p270 = scmp.eq.s32.totalorder %s269, 0
      %s272 = sadd.s32 %s271, 1
      %s273 = scalar_select %p270, %s271, %s272
      %p276 = pneg %p270
      %p277 = scmp.eq.s32.totalorder %s27, 3
      %p278 = por %p276, %p277
      %p279 = scmp.ne.s32.totalorder %s271, %s274
      %p280 = scmp.eq.s32.totalorder %s27, 0
      %p281 = por %p279, %p280
      %p282 = scmp.ne.s32.totalorder %s271, %s274
      %p283 = scmp.eq.s32.totalorder %s32, 3
      %p284 = por %p282, %p283
      %p285 = scmp.ne.s32.totalorder %s274, %s275
      %p286 = scmp.eq.s32.totalorder %s32, 0
      %p287 = por %p285, %p286
      %p288 = scmp.ne.s32.totalorder %s274, %s275
      %p289 = scmp.eq.s32.totalorder %s33, 3
      %p290 = por %p288, %p289
      %p292 = scmp.ne.s32.totalorder %s275, %s291
      %p293 = scmp.eq.s32.totalorder %s33, 0
      %p294 = por %p292, %p293
      %p295 = scmp.le.s32.totalorder 1, %s27
      %p296 = scmp.lt.s32.totalorder %s27, 5
      %p297 = pnand %p295, %p296
      %p298 = pneg %p297
      // Predicated region
      $region9: #{tpu_custom_call.1} parent=5 // pred_check
        _
      $region10: #{tpu_custom_call.1} parent=5 // pred_check_branch
        %300 = sbr.rel (%p297) target = $region12
      $region11: #{tpu_custom_call.1} parent=5 // pred_region
        %s301 = ssub.s32 %s27, 1
        // Predicated region
        $region13: #{tpu_custom_call.1} parent=11 // pred_check
          %p302 = pneg %p168
        $region14: #{tpu_custom_call.1} parent=11 // pred_check_branch
          %304 = sbr.rel (%p302) target = $region16
        $region15: #{tpu_custom_call.1} parent=11 // pred_region
          _
        $region16: #{tpu_custom_call.1} parent=11 // pred_fallthru
          _
        // Predicated region
        $region17: #{tpu_custom_call.1} parent=11 // pred_check
          %p305 = pneg %p189
        $region18: #{tpu_custom_call.1} parent=11 // pred_check_branch
          %307 = sbr.rel (%p305) target = $region20
        $region19: #{tpu_custom_call.1} parent=11 // pred_region
          _
        $region20: #{tpu_custom_call.1} parent=11 // pred_fallthru
          _
        // Predicated region
        $region21: #{tpu_custom_call.1} parent=11 // pred_check
          %p308 = pneg %p210
        $region22: #{tpu_custom_call.1} parent=11 // pred_check_branch
          %310 = sbr.rel (%p308) target = $region24
        $region23: #{tpu_custom_call.1} parent=11 // pred_region
          _
        $region24: #{tpu_custom_call.1} parent=11 // pred_fallthru
          _
        // Predicated region
        $region25: #{tpu_custom_call.1} parent=11 // pred_check
          %p311 = pneg %p231
        $region26: #{tpu_custom_call.1} parent=11 // pred_check_branch
          %313 = sbr.rel (%p311) target = $region28
        $region27: #{tpu_custom_call.1} parent=11 // pred_region
          _
        $region28: #{tpu_custom_call.1} parent=11 // pred_fallthru
          _
      $region12: #{tpu_custom_call.1} parent=5 // pred_fallthru
        _
      %p314 = scmp.lt.s32.totalorder %s27, 4
      // Predicated region
      $region29: #{tpu_custom_call.1} parent=5 // pred_check
        %p315 = pneg %p314
      $region30: #{tpu_custom_call.1} parent=5 // pred_check_branch
        %317 = sbr.rel (%p315) target = $region32
      $region31: #{tpu_custom_call.1} parent=5 // pred_region
        // Predicated region
        $region33: #{tpu_custom_call.1} parent=31 // pred_check
          %p318 = pneg %p59
        $region34: #{tpu_custom_call.1} parent=31 // pred_check_branch
          %320 = sbr.rel (%p318) target = $region36
        $region35: #{tpu_custom_call.1} parent=31 // pred_region
          %s321 = sand.u32 %s49, 1
          %s322 = scalar_lea.sflag [#allocation4], %s321
          %s323 = sand.u32 %s49, 1
          %s324 = smul.addr %s323, 4
          %s325 = scalar_lea.vmem [#allocation3], %s324
          %327 = vsyncadd %s322, 0
          %s328 = smul.addr %s34, 4
          %s329 = scalar_lea.hbm %s0, %s328
          %s331 = sshll.u32 %s329, 4
          %s332 = int_to_ptr.hbm [resolvable:$true] %s331
          %s333 = sshll.u32 %s325, 4
          %s334 = int_to_ptr.vmem [resolvable:$true] %s333
          %336 = dma.hbm_to_vmem [thread:$0]  %s332, 64, %s334, %s322
        $region36: #{tpu_custom_call.1} parent=31 // pred_fallthru
          _
        // Predicated region
        $region37: #{tpu_custom_call.1} parent=31 // pred_check
          %p337 = pneg %p85
        $region38: #{tpu_custom_call.1} parent=31 // pred_check_branch
          %339 = sbr.rel (%p337) target = $region40
        $region39: #{tpu_custom_call.1} parent=31 // pred_region
          %p340 = scmp.lt.s32.totalorder %s34, 1
          %s341 = scalar_select %p340, %s34, 1
          %s342 = smul.addr %s341, 8
          %s343 = scalar_lea.vmem %s1, %s342
        $region40: #{tpu_custom_call.1} parent=31 // pred_fallthru
          _
        // Predicated region
        $region41: #{tpu_custom_call.1} parent=31 // pred_check
          %p344 = pneg %p113
        $region42: #{tpu_custom_call.1} parent=31 // pred_check_branch
          %346 = sbr.rel (%p344) target = $region44
        $region43: #{tpu_custom_call.1} parent=31 // pred_region
          %p347 = scmp.lt.s32.totalorder %s34, 1
          %s348 = scalar_select %p347, %s34, 1
          %p349 = scmp.lt.s32.totalorder %s35, 1
          %s350 = scalar_select %p349, %s35, 1
          %s351 = smul.addr %s348, 2
          %s352 = sadd.s32 %s350, %s351
          %s353 = smul.addr %s352, 4
          %s354 = scalar_lea.vmem %s2, %s353
        $region44: #{tpu_custom_call.1} parent=31 // pred_fallthru
          _
        // Predicated region
        $region45: #{tpu_custom_call.1} parent=31 // pred_check
          %p355 = pneg %p141
        $region46: #{tpu_custom_call.1} parent=31 // pred_check_branch
          %357 = sbr.rel (%p355) target = $region48
        $region47: #{tpu_custom_call.1} parent=31 // pred_region
          %s358 = sand.u32 %s131, 1
          %s359 = scalar_lea.sflag [#allocation7], %s358
          %s360 = sand.u32 %s131, 1
          %s361 = scalar_lea.vmem [#allocation6], %s360
          %363 = vsyncadd %s359, 0
          %s364 = smul.addr %s34, 2
          %s365 = sadd.s32 %s35, %s364
          %s366 = scalar_lea.hbm %s3, %s365
          %s368 = sshll.u32 %s366, 4
          %s369 = int_to_ptr.hbm [resolvable:$true] %s368
          %s370 = sshll.u32 %s361, 4
          %s371 = int_to_ptr.vmem [resolvable:$true] %s370
          %373 = dma.hbm_to_vmem [thread:$0]  %s369, 16, %s371, %s359
        $region48: #{tpu_custom_call.1} parent=31 // pred_fallthru
          _
      $region32: #{tpu_custom_call.1} parent=5 // pred_fallthru
        _
      %p374 = scmp.le.s32.totalorder 1, %s27
      %p375 = scmp.lt.s32.totalorder %s27, 5
      %p376 = pnand %p374, %p375
      %p377 = pneg %p376
      // Predicated region
      $region49: #{tpu_custom_call.1} parent=5 // pred_check
        _
      $region50: #{tpu_custom_call.1} parent=5 // pred_check_branch
        %379 = sbr.rel (%p376) target = $region52
      $region51: #{tpu_custom_call.1} parent=5 // pred_region
        %s380 = ssub.s32 %s27, 1
        %s381 = sand.u32 %s52, 1
        %s382 = scalar_lea.sflag [#allocation4], %s381
        %s383 = sand.u32 %s52, 1
        %s384 = smul.addr %s383, 4
        %s385 = scalar_lea.vmem [#allocation3], %s384
        // Predicated region
        $region53: #{tpu_custom_call.1} parent=51 // pred_check
          %p386 = pneg %p65
        $region54: #{tpu_custom_call.1} parent=51 // pred_check_branch
          %388 = sbr.rel (%p386) target = $region56
        $region55: #{tpu_custom_call.1} parent=51 // pred_region
          %390 = dma.done %s382, 64
        $region56: #{tpu_custom_call.1} parent=51 // pred_fallthru
          _
        %s391 = sand.u32 %s134, 1
        %s392 = scalar_lea.sflag [#allocation7], %s391
        %s393 = sand.u32 %s134, 1
        %s394 = scalar_lea.vmem [#allocation6], %s393
        // Predicated region
        $region57: #{tpu_custom_call.1} parent=51 // pred_check
          %p395 = pneg %p147
        $region58: #{tpu_custom_call.1} parent=51 // pred_check_branch
          %397 = sbr.rel (%p395) target = $region60
        $region59: #{tpu_custom_call.1} parent=51 // pred_region
          %399 = dma.done %s392, 16
        $region60: #{tpu_custom_call.1} parent=51 // pred_fallthru
          _
        %s400 = sand.u32 %s52, 1
        %s401 = scalar_lea.sflag [#allocation4], %s400
        %s402 = sand.u32 %s52, 1
        %s403 = smul.addr %s402, 4
        %s404 = scalar_lea.vmem [#allocation3], %s403
        %p405 = pneg %p65
        %p406 = pneg %p62
        %p407 = scmp.lt.s32.totalorder %s36, 1
        %s408 = scalar_select %p407, %s36, 1
        %s409 = smul.addr %s408, 8
        %s410 = scalar_lea.vmem %s1, %s409
        %p411 = pneg %p91
        %p412 = pneg %p88
        %p413 = scmp.lt.s32.totalorder %s36, 1
        %s414 = scalar_select %p413, %s36, 1
        %p415 = scmp.lt.s32.totalorder %s37, 1
        %s416 = scalar_select %p415, %s37, 1
        %s417 = smul.addr %s414, 2
        %s418 = sadd.s32 %s416, %s417
        %s419 = smul.addr %s418, 4
        %s420 = scalar_lea.vmem %s2, %s419
        %p421 = pneg %p119
        %p422 = pneg %p116
        %s423 = sand.u32 %s134, 1
        %s424 = scalar_lea.sflag [#allocation7], %s423
        %s425 = sand.u32 %s134, 1
        %s426 = scalar_lea.vmem [#allocation6], %s425
        %p427 = pneg %p147
        %p428 = pneg %p144
        %p429 = pneg %p168
        %p430 = pneg %p165
        %p431 = pneg %p189
        %p432 = pneg %p186
        %p433 = pneg %p210
        %p434 = pneg %p207
        %p435 = pneg %p231
        %p436 = pneg %p228
        %p437 = pneg %p259
        %p438 = pneg %p256
        %s439 = sand.u32 %s246, 1
        %s440 = scalar_lea.sflag [#allocation5], %s439
        %s441 = sand.u32 %s246, 1
        %s442 = smul.addr %s441, 4
        %s443 = scalar_lea.vmem [#allocation8], %s442
        %p444 = pneg %p287
        %p445 = pneg %p284
        %p446 = scmp.lt.s32.totalorder %s36, 1
        %s447 = scalar_select %p446, %s36, 1
        %p448 = scmp.lt.s32.totalorder %s37, 1
        %s449 = scalar_select %p448, %s37, 1
        %s450 = smul.addr %s447, 2
        %s451 = sadd.s32 %s449, %s450
        %s452 = smul.addr %s451, 8
        %s453 = scalar_lea.vmem %s9, %s452
        %p454 = scmp.lt.s32.totalorder %s36, 1
        %s455 = scalar_select %p454, %s36, 1
        %s456 = smul.addr %s455, 8
        %s457 = scalar_lea.vmem %s1, %s456
        %p458 = scmp.lt.s32.totalorder %s36, 1
        %s459 = scalar_select %p458, %s36, 1
        %p460 = scmp.lt.s32.totalorder %s37, 1
        %s461 = scalar_select %p460, %s37, 1
        %s462 = smul.addr %s459, 2
        %s463 = sadd.s32 %s461, %s462
        %s464 = smul.addr %s463, 4
        %s465 = scalar_lea.vmem %s2, %s464
        %p466 = scmp.lt.s32.totalorder %s36, 1
        %s467 = scalar_select %p466, %s36, 1
        %p468 = scmp.lt.s32.totalorder %s37, 1
        %s469 = scalar_select %p468, %s37, 1
        %s470 = smul.addr %s467, 2
        %s471 = sadd.s32 %s469, %s470
        %s472 = smul.addr %s471, 8
        %s473 = scalar_lea.vmem %s9, %s472
        %v475 = vld [vmem:[%s385] sm:$0xf]
        %v476 = vld [vmem:[%s465] sm:$0xf]
        %v477 = vld [vmem:[%s394] sm:$0x1]
        %v478 = vld [vmem:[%s4] sm:$0xf]
        %v479 = vld [vmem:[%s4 + $0x4] sm:$0xf]
        %v480 = vld [vmem:[%s4 + $0x8] sm:$0xf]
        %v481 = vld [vmem:[%s4 + $0xc] sm:$0xf]
        %v482 = vld [vmem:[%s5] sm:$0x1]
        %v484 = vperm.slane %v482, 0
        %v490 = vunpack.c.l.b16 %v478
        %v491 = vunpack.c.l.b16 %v479
        %v492 = vunpack.c.l.b16 %v480
        %v493 = vunpack.c.l.b16 %v481
        %v494 = vpack.c.b16 %v491, %v490
        %v495 = vpack.c.b16 %v493, %v492
        %vm498 = vcmask 261120
        %v500 = vsel %vm498, %v476, 0
        %502 = vmatpush.bf16.msra.mxu0 0
        %503 = vmatpush.bf16.msra.mxu0 0
        %504 = vmatpush.bf16.msra.mxu0 0
        %505 = vmatpush.bf16.msra.mxu0 0
        %506 = vmatpush.bf16.msra.mxu0 0
        %507 = vmatpush.bf16.msra.mxu0 0
        %508 = vmatpush.bf16.msra.mxu0 %v495
        %509 = vmatpush.bf16.msra.mxu0 %v494
        %510 = vmatmul.bf16.gmra.mxu0 %v500
        %v511 = vpop.f32.mrf.mxu0
        %v512 = vadd.f32 %v484, %v511
        %v513 = vpop.f32.mrf.mxu0
        %514 = vdwg.mxu0
        %v515 = vpack.c.bf16 %v512, %v512
        %v517 = vsel %vm498, %v475, 0
        %v520 = vsel %vm498, %v515, 0
        %522 = vmatpush.bf16.xpose.msra.mxu0 0
        %523 = vmatpush.bf16.xpose.msra.mxu0 0
        %524 = vmatpush.bf16.xpose.msra.mxu0 0
        %525 = vmatpush.bf16.xpose.msra.mxu0 0
        %526 = vmatpush.bf16.xpose.msra.mxu0 0
        %527 = vmatpush.bf16.xpose.msra.mxu0 0
        %528 = vmatpush.bf16.xpose.msra.mxu0 0
        %529 = vmatpush.bf16.xpose.msra.mxu0 %v520
        %530 = vmatmul.bf16.gmra.mxu0 %v517
        %v531 = vpop.f32.mrf.mxu0
        %v532 = vadd.f32 0.0, %v531
        %v533 = vpop.f32.mrf.mxu0
        %534 = vdwg.mxu0
        %v535 = vmul.f32 %v532, 0.17677669
        %vm536 = vcmp.eq.s32.totalorder %v477, 0
        %v537 = vsel %vm536, 1, 0
        %v538 = vperm.slane %v537, 0
        %vm539 = vcmp.eq.s32.totalorder %v538, 1
        %v540 = vsel %vm539, -1e+09, %v535
        %vm541 = vcmask 64512
        %v542 = vsel %vm541, %v540, -inf
        %543 = vmax.xlane.f32.xlu0 %v542
        %v544 = vpop.xlane.xlu0 %543
        %v545 = vsub.f32 %v540, %v544
        %v546 = vmul.f32 %v545, 1.442695
        %v547 = vpow.pop %v546
        %v548 = vsel %vm541, %v547, 0.0
        %549 = vadd.xlane.f32.xlu0 %v548
        %v550 = vpop.xlane.xlu0 %549
        %v551 = vrcp.pop %v550
        %v552 = vmul.f32 %v550, %v551
        %v553 = vsub.f32 1.0, %v552
        %v554 = vmul.f32 %v551, %v553
        %v555 = vadd.f32 %v551, %v554
        %vm556 = vweird.f32 %v550
        %vm557 = vweird.f32 %v551
        %vm558 = vmor %vm556, %vm557
        %v559 = vsel %vm558, %v551, %v555
        %v560 = vand.u32 2147483647, %v550
        %vm561 = vcmp.eq.f32.partialorder %v560, 8.507059e+37
        %v562 = vand.u32 %v550, 2147483648
        %v563 = vor.u32 1.1754944e-38, %v562
        %v564 = vsel %vm561, %v563, %v559
        %v565 = vmul.f32 %v547, %v564
        %v566 = vld [vmem:[%s6] sm:$0xf]
        %v567 = vld [vmem:[%s6 + $0x4] sm:$0xf]
        %v568 = vld [vmem:[%s6 + $0x8] sm:$0xf]
        %v569 = vld [vmem:[%s6 + $0xc] sm:$0xf]
        %v570 = vld [vmem:[#allocation2] sm:$0x1]
        %v572 = vperm.slane %v570, 0
        %v578 = vunpack.c.l.b16 %v566
        %v579 = vunpack.c.l.b16 %v567
        %v580 = vunpack.c.l.b16 %v568
        %v581 = vunpack.c.l.b16 %v569
        %v582 = vpack.c.b16 %v579, %v578
        %v583 = vpack.c.b16 %v581, %v580
        %586 = vmatpush.bf16.msra.mxu0 0
        %587 = vmatpush.bf16.msra.mxu0 0
        %588 = vmatpush.bf16.msra.mxu0 0
        %589 = vmatpush.bf16.msra.mxu0 0
        %590 = vmatpush.bf16.msra.mxu0 0
        %591 = vmatpush.bf16.msra.mxu0 0
        %592 = vmatpush.bf16.msra.mxu0 %v583
        %593 = vmatpush.bf16.msra.mxu0 %v582
        %594 = vmatmul.bf16.gmra.mxu0 %v500
        %v595 = vpop.f32.mrf.mxu0
        %v596 = vadd.f32 %v572, %v595
        %v597 = vpop.f32.mrf.mxu0
        %598 = vdwg.mxu0
        %v599 = vld [vmem:[%s457] sm:$0xff]
        %v601 = vsel %vm541, %v565, 0
        %603 = vmatpush.msra.mxu0 0.0
        %604 = vmatpush.msra.mxu0 0.0
        %605 = vmatpush.msra.mxu0 0.0
        %606 = vmatpush.msra.mxu0 0.0
        %607 = vmatpush.msra.mxu0 0.0
        %608 = vmatpush.msra.mxu0 0.0
        %609 = vmatpush.msra.mxu0 0.0
        %610 = vmatpush.msra.mxu0 0.0
        %611 = vmatpush.msra.mxu0 0.0
        %612 = vmatpush.msra.mxu0 0.0
        %613 = vmatpush.msra.mxu0 0.0
        %614 = vmatpush.msra.mxu0 0.0
        %615 = vmatpush.msra.mxu0 0.0
        %616 = vmatpush.msra.mxu0 0.0
        %617 = vmatpush.msra.mxu0 0.0
        %618 = vmatpush.msra.mxu0 %v596
        %619 = vmatmul.f32.gmra.mxu0 %v601
        %v620 = vpop.f32.mrf.mxu0
        %v621 = vadd.f32 0.0, %v620
        %622 = vdwg.mxu0
        %v623 = vadd.f32 %v599, %v621
        %v624 = vxor.u32 %v623, 2147483648
        %v625 = vmul.f32 %v624, 1.442695
        %v626 = vpow.pop %v625
        %v627 = vadd.f32 %v626, 1.0
        %v628 = vrcp.pop %v627
        %v629 = vmul.f32 %v627, %v628
        %v630 = vsub.f32 1.0, %v629
        %v631 = vmul.f32 %v628, %v630
        %v632 = vadd.f32 %v628, %v631
        %vm633 = vweird.f32 %v627
        %vm634 = vweird.f32 %v628
        %vm635 = vmor %vm633, %vm634
        %v636 = vsel %vm635, %v628, %v632
        %v637 = vand.u32 2147483647, %v627
        %vm638 = vcmp.eq.f32.partialorder %v637, 8.507059e+37
        %v639 = vand.u32 %v627, 2147483648
        %v640 = vor.u32 1.1754944e-38, %v639
        %v641 = vsel %vm638, %v640, %v636
        %v642 = vmul.f32 1.0, %v641
        %vm643 = vcmask 7168
        %644 = vst.msk [vmem:[%s473] sm:$0xff] %vm643, %v642
        %646 = vset.pattern.permute.xlu0 0
        %647 = vperm.xlu0 %646, %v642
        %v648 = vpop.permute.xlu0 %647
        %v650 = vmul.f32 %v648, %v565
        %v651 = vpack.c.bf16 %v650, %v650
        %vm652 = vcmask 60416
        %653 = vst.msk [vmem:[%s443] sm:$0xf] %vm652, %v651
        %s654 = sand.u32 %s246, 1
        %s655 = scalar_lea.sflag [#allocation5], %s654
        %s656 = sand.u32 %s246, 1
        %s657 = smul.addr %s656, 4
        %s658 = scalar_lea.vmem [#allocation8], %s657
        %p659 = scmp.lt.s32.totalorder %s36, 1
        %s660 = scalar_select %p659, %s36, 1
        %p661 = scmp.lt.s32.totalorder %s37, 1
        %s662 = scalar_select %p661, %s37, 1
        %s663 = smul.addr %s660, 2
        %s664 = sadd.s32 %s662, %s663
        %s665 = smul.addr %s664, 8
        %s666 = scalar_lea.vmem %s9, %s665
        // Predicated region
        $region61: #{tpu_custom_call.1} parent=51 // pred_check
          %p667 = pneg %p256
        $region62: #{tpu_custom_call.1} parent=51 // pred_check_branch
          %669 = sbr.rel (%p667) target = $region64
        $region63: #{tpu_custom_call.1} parent=51 // pred_region
          %671 = vsyncadd %s655, 0
          %s672 = smul.addr %s36, 2
          %s673 = sadd.s32 %s37, %s672
          %s674 = smul.addr %s673, 4
          %s675 = scalar_lea.hbm %s8, %s674
          %s677 = sshll.u32 %s658, 4
          %s678 = int_to_ptr.vmem [resolvable:$true] %s677
          %s679 = sshll.u32 %s675, 4
          %s680 = int_to_ptr.hbm [resolvable:$true] %s679
          %682 = dma.vmem_to_hbm [thread:$0]  %s678, 64, %s680, %s655
        $region64: #{tpu_custom_call.1} parent=51 // pred_fallthru
          _
        // Predicated region
        $region65: #{tpu_custom_call.1} parent=51 // pred_check
          %p683 = pneg %p284
        $region66: #{tpu_custom_call.1} parent=51 // pred_check_branch
          %685 = sbr.rel (%p683) target = $region68
        $region67: #{tpu_custom_call.1} parent=51 // pred_region
          _
        $region68: #{tpu_custom_call.1} parent=51 // pred_fallthru
          _
      $region52: #{tpu_custom_call.1} parent=5 // pred_fallthru
        _
      %p686 = scmp.le.s32.totalorder 2, %s27
      // Predicated region
      $region69: #{tpu_custom_call.1} parent=5 // pred_check
        %p687 = pneg %p686
      $region70: #{tpu_custom_call.1} parent=5 // pred_check_branch
        %689 = sbr.rel (%p687) target = $region72
      $region71: #{tpu_custom_call.1} parent=5 // pred_region
        %s690 = ssub.s32 %s27, 2
        // Predicated region
        $region73: #{tpu_custom_call.1} parent=71 // pred_check
          %p691 = pneg %p262
        $region74: #{tpu_custom_call.1} parent=71 // pred_check_branch
          %693 = sbr.rel (%p691) target = $region76
        $region75: #{tpu_custom_call.1} parent=71 // pred_region
          %s694 = sand.u32 %s247, 1
          %s695 = scalar_lea.sflag [#allocation5], %s694
          %s696 = sand.u32 %s247, 1
          %s697 = smul.addr %s696, 4
          %s698 = scalar_lea.vmem [#allocation8], %s697
          %700 = dma.done %s695, 64
        $region76: #{tpu_custom_call.1} parent=71 // pred_fallthru
          _
        // Predicated region
        $region77: #{tpu_custom_call.1} parent=71 // pred_check
          %p701 = pneg %p290
        $region78: #{tpu_custom_call.1} parent=71 // pred_check_branch
          %703 = sbr.rel (%p701) target = $region80
        $region79: #{tpu_custom_call.1} parent=71 // pred_region
          %p704 = scmp.lt.s32.totalorder %s38, 1
          %s705 = scalar_select %p704, %s38, 1
          %p706 = scmp.lt.s32.totalorder %s39, 1
          %s707 = scalar_select %p706, %s39, 1
          %s708 = smul.addr %s705, 2
          %s709 = sadd.s32 %s707, %s708
          %s710 = smul.addr %s709, 8
          %s711 = scalar_lea.vmem %s9, %s710
        $region80: #{tpu_custom_call.1} parent=71 // pred_fallthru
          _
      $region72: #{tpu_custom_call.1} parent=5 // pred_fallthru
        _
    $region6: #{tpu_custom_call.1} parent=1 // loop_footer
      %s31 = sadd.s32 1, %s27
    $region7: #{tpu_custom_call.1} parent=1 // loop_footer_branch
      %26 = sbr.rel target = $region3
    $region8: #{tpu_custom_call.1} parent=1 // loop_exit
      _
    %712 = vsyncpa [#allocation4], 1
    %s713 = scalar_lea.sflag [#allocation4], 1
    %714 = vsyncpa %s713, 1
    %715 = vsyncpa [#allocation7], 1
    %s716 = scalar_lea.sflag [#allocation7], 1
    %717 = vsyncpa %s716, 1
    %718 = vsyncpa [#allocation5], 1
    %s719 = scalar_lea.sflag [#allocation5], 1
    %720 = vsyncpa %s719, 1

</llo_original>
